<compile_context>
chip_gen: v7x
topology: tpu7x:2x2x1
jax: 0.10.0
libtpu: 0.0.40
codegen_flags: <defaults>
</compile_context>

<pallas_src>
import functools

import jax
import jax.numpy as jnp
from jax import lax
from jax.experimental import pallas as pl
from jax.experimental.pallas import tpu as pltpu

# ----- module configuration:
#       MLP_ST(inp_dim=32, out_dim=16, num_layers=2, relu=True, bias=True,
#              dropout=False, norm=True, layers=[])
BATCH = 2
LENGTH = 16        # Conv1d spatial length L
INP_DIM = 32
OUT_DIM = 16
NUM_LAYERS = 2     # one hidden Conv1d block + final Conv1d
RELU_OUT = True
USE_BIAS = True
USE_NORM = True
LN_EPS = 1e-5


# ---------------- fused whole-network kernel (one batch element / step) ----
def _mlp_st_kernel(x_ref, *refs, length, layer_cfg):
    """Channels-first. refs = [per layer: w (Cout,3*Cin) bf16, b (Cout,1) f32,
    [ln_w (Cout,1), ln_b (Cout,1)] ...] + [out_ref]."""
    out_ref = refs[-1]
    param_refs = refs[:-1]

    h = x_ref[0].astype(jnp.float32)                      # (C_in, L)

    # Boundary masks for the zero padding of the k=3 conv, built once
    # (hoisted out of the layer loop).  Column 0 has no "previous" sample,
    # column L-1 has no "next" sample.
    lane = lax.broadcasted_iota(jnp.int32, (1, length), 1)
    mask_prev = (lane != 0).astype(jnp.float32)
    mask_next = (lane != length - 1).astype(jnp.float32)

    p = 0
    for relu_flag, norm_flag in layer_cfg:
        w_ref, b_ref = param_refs[p], param_refs[p + 1]
        p += 2

        # Conv taps via circular roll along the length (lane) axis + boundary
        # mask -- pure data movement on the XLU/VPU, no shift matmuls.
        h_prev = pltpu.roll(h, shift=1, axis=1) * mask_prev           # h[l-1]
        h_next = pltpu.roll(h, shift=length - 1, axis=1) * mask_next  # h[l+1]
        h3 = jnp.concatenate([h_prev, h, h_next], axis=0)  # (3*Cin, L)

        # Single merged-tap matmul: (Cout, 3*Cin) @ (3*Cin, L), bf16 operands,
        # f32 accumulation.  Bias add in f32.
        y = jnp.dot(w_ref[...], h3.astype(jnp.bfloat16),
                    preferred_element_type=jnp.float32) + b_ref[...]

        if norm_flag:
            ln_w_ref, ln_b_ref = param_refs[p], param_refs[p + 1]
            p += 2
            # torch: transpose -> LayerNorm(C) -> transpose.  Channels-first
            # here, so it is a reduction over the channel (sublane) axis,
            # with biased variance and eps inside rsqrt, all in f32.
            mu = jnp.mean(y, axis=0, keepdims=True)
            var = jnp.mean((y - mu) ** 2, axis=0, keepdims=True)
            y = (y - mu) * lax.rsqrt(var + LN_EPS) * ln_w_ref[...] + ln_b_ref[...]

        if relu_flag:
            y = jnp.maximum(y, 0.0)
        h = y

    out_ref[0] = h.astype(out_ref.dtype)


def _const_spec(a):
    nd = a.ndim
    return pl.BlockSpec(a.shape, lambda b, _nd=nd: (0,) * _nd)


def mlp_st_forward(x, layers):
    """x: (B, C_in, L) float32 (nn.Conv1d layout). Returns (B, out_dim, L)."""
    B, C_in, L = x.shape

    layer_cfg = []
    flat_params = []
    for (relu_flag, norm_flag), prm in layers:
        layer_cfg.append((relu_flag, norm_flag))
        w = prm["w"]                                   # (Cout, Cin, 3), torch layout
        cout = w.shape[0]
        # Pack taps [prev | center | next] along the contraction axis so the
        # kernel does one K = 3*Cin matmul; bf16 for the MXU.
        w_packed = jnp.concatenate([w[:, :, 0], w[:, :, 1], w[:, :, 2]],
                                   axis=1).astype(jnp.bfloat16)
        flat_params.append(w_packed)
        flat_params.append(prm["b"].reshape(cout, 1).astype(jnp.float32))
        if norm_flag:
            flat_params.append(prm["ln_w"].reshape(cout, 1).astype(jnp.float32))
            flat_params.append(prm["ln_b"].reshape(cout, 1).astype(jnp.float32))
    C_out = layers[-1][1]["w"].shape[0]

    kernel = functools.partial(_mlp_st_kernel, length=L,
                               layer_cfg=tuple(layer_cfg))

    # TODO(synk): at real sizes, tile L into multiples of 128 lanes with a
    # +/-1 halo in the index_map and pad channels to 128 for lane-dense
    # stores; at these toy shapes everything fits one grid step per sequence.
    return pl.pallas_call(
        kernel,
        grid=(B,),
        out_shape=jax.ShapeDtypeStruct((B, C_out, L), x.dtype),
        in_specs=[pl.BlockSpec((1, C_in, L), lambda b: (b, 0, 0))]
                 + [_const_spec(a) for a in flat_params],
        out_specs=pl.BlockSpec((1, C_out, L), lambda b: (b, 0, 0)),
        compiler_params=pltpu.CompilerParams(
            dimension_semantics=("parallel",),
            vmem_limit_bytes=32 * 1024 * 1024),
    )(x, *flat_params)


# ---------------- pure-JAX reference (correctness check) ----------------
def _ref_forward(x, layers):
    h = x.astype(jnp.float32)                          # (B, C, L)
    for (relu_flag, norm_flag), prm in layers:
        w, b = prm["w"], prm["b"]                      # (Cout, Cin, 3), (Cout,)
        pad = jnp.pad(h, ((0, 0), (0, 0), (1, 1)))
        y = (jnp.einsum("bcl,oc->bol", pad[:, :, :-2], w[:, :, 0])
             + jnp.einsum("bcl,oc->bol", pad[:, :, 1:-1], w[:, :, 1])
             + jnp.einsum("bcl,oc->bol", pad[:, :, 2:], w[:, :, 2])
             + b[None, :, None])
        if norm_flag:
            yt = jnp.transpose(y, (0, 2, 1))           # (B, L, C): LN over C
            mu = jnp.mean(yt, axis=-1, keepdims=True)
            var = jnp.mean((yt - mu) ** 2, axis=-1, keepdims=True)
            yt = (yt - mu) * lax.rsqrt(var + LN_EPS) * prm["ln_w"] + prm["ln_b"]
            y = jnp.transpose(yt, (0, 2, 1))
        if relu_flag:
            y = jnp.maximum(y, 0.0)
        h = y
    return h


# ---------------- parameter init (deterministic, synthetic) ----------------
def init_params(key):
    specs = []
    incoming = INP_DIM
    for _ in range(NUM_LAYERS - 1):
        specs.append((incoming, incoming, True, USE_NORM))   # hidden block
    specs.append((incoming, OUT_DIM, RELU_OUT, False))       # final conv

    layers = []
    for li, (cin, cout, relu_flag, norm_flag) in enumerate(specs):
        kw, kb = jax.random.split(jax.random.fold_in(key, li))
        bound = 1.0 / (3 * cin) ** 0.5               # torch Conv1d default init
        prm = {"w": jax.random.uniform(kw, (cout, cin, 3), jnp.float32,
                                       -bound, bound)}
        if USE_BIAS:
            prm["b"] = jax.random.uniform(kb, (cout,), jnp.float32,
                                          -bound, bound)
        else:
            prm["b"] = jnp.zeros((cout,), jnp.float32)
        if norm_flag:
            prm["ln_w"] = jnp.ones((cout,), jnp.float32)
            prm["ln_b"] = jnp.zeros((cout,), jnp.float32)
        layers.append(((relu_flag, norm_flag), prm))
    return layers


if __name__ == "__main__":
    key = jax.random.PRNGKey(0)
    kx, kp = jax.random.split(key)

    # x: (batch, channels, length) — nn.Conv1d input layout.
    x = jax.random.normal(kx, (BATCH, INP_DIM, LENGTH), dtype=jnp.float32)
    layers = init_params(kp)

    out = jax.block_until_ready(mlp_st_forward(x, layers))
    assert out.shape == (BATCH, OUT_DIM, LENGTH), out.shape

    ref = jax.block_until_ready(_ref_forward(x, layers))
    assert jnp.allclose(out, ref, atol=5e-2, rtol=5e-2), \
        float(jnp.max(jnp.abs(out - ref)))

    print("KERNEL_OK")
</pallas_src>

<mosaic_0001>
module attributes {stable_mosaic.version = 11 : i64} {
  func.func @_mlp_st_kernel(%arg0: i32, %arg1: memref<1x32x16xf32, #tpu.memory_space<vmem>>, %arg2: memref<32x96xbf16, #tpu.memory_space<vmem>>, %arg3: memref<32x1xf32, #tpu.memory_space<vmem>>, %arg4: memref<32x1xf32, #tpu.memory_space<vmem>>, %arg5: memref<32x1xf32, #tpu.memory_space<vmem>>, %arg6: memref<16x96xbf16, #tpu.memory_space<vmem>>, %arg7: memref<16x1xf32, #tpu.memory_space<vmem>>, %arg8: memref<1x16x16xf32, #tpu.memory_space<vmem>>) attributes {dimension_semantics = [#tpu.dimension_semantics<parallel>], iteration_bounds = array<i64: 2>, scalar_prefetch = 0 : i64, scratch_operands = 0 : i64, tpu.core_type = #tpu.core_type<tc>, window_params = [{transform_indices = @transform_0, window_bounds = array<i64: 1, 32, 16>}, {pipeline_mode = #tpu.pipeline_mode<synchronous>, transform_indices = @transform_1, window_bounds = array<i64: 32, 96>}, {pipeline_mode = #tpu.pipeline_mode<synchronous>, transform_indices = @transform_2, window_bounds = array<i64: 32, 1>}, {pipeline_mode = #tpu.pipeline_mode<synchronous>, transform_indices = @transform_3, window_bounds = array<i64: 32, 1>}, {pipeline_mode = #tpu.pipeline_mode<synchronous>, transform_indices = @transform_4, window_bounds = array<i64: 32, 1>}, {pipeline_mode = #tpu.pipeline_mode<synchronous>, transform_indices = @transform_5, window_bounds = array<i64: 16, 96>}, {pipeline_mode = #tpu.pipeline_mode<synchronous>, transform_indices = @transform_6, window_bounds = array<i64: 16, 1>}, {transform_indices = @transform_7, window_bounds = array<i64: 1, 16, 16>}]} {
    %c0 = arith.constant 0 : index
    %c0_0 = arith.constant 0 : index
    %c0_1 = arith.constant 0 : index
    %0 = vector.load %arg1[%c0, %c0_0, %c0_1] : memref<1x32x16xf32, #tpu.memory_space<vmem>>, vector<1x32x16xf32>
    %1 = vector.shape_cast %0 : vector<1x32x16xf32> to vector<32x16xf32>
    %2 = tpu.iota {dimensions = array<i32: 1>} : vector<1x16xi32>
    %c0_i32 = arith.constant 0 : i32
    %3 = vector.broadcast %c0_i32 : i32 to vector<1x16xi32>
    %4 = arith.cmpi ne, %2, %3 : vector<1x16xi32>
    %5 = arith.extui %4 : vector<1x16xi1> to vector<1x16xi32>
    %6 = arith.sitofp %5 : vector<1x16xi32> to vector<1x16xf32>
    %c15_i32 = arith.constant 15 : i32
    %7 = vector.broadcast %c15_i32 : i32 to vector<1x16xi32>
    %8 = arith.cmpi ne, %2, %7 : vector<1x16xi32>
    %9 = arith.extui %8 : vector<1x16xi1> to vector<1x16xi32>
    %10 = arith.sitofp %9 : vector<1x16xi32> to vector<1x16xf32>
    %c1_i32 = arith.constant 1 : i32
    %11 = tpu.dynamic_rotate %1 by %c1_i32 dim 1 : vector<32x16xf32>, i32 -> vector<32x16xf32>
    %12 = vector.broadcast %6 : vector<1x16xf32> to vector<32x16xf32>
    %13 = arith.mulf %11, %12 : vector<32x16xf32>
    %c15_i32_2 = arith.constant 15 : i32
    %14 = tpu.dynamic_rotate %1 by %c15_i32_2 dim 1 : vector<32x16xf32>, i32 -> vector<32x16xf32>
    %15 = vector.broadcast %10 : vector<1x16xf32> to vector<32x16xf32>
    %16 = arith.mulf %14, %15 : vector<32x16xf32>
    %17 = tpu.concatenate %13, %1, %16 in 0 : vector<32x16xf32>, vector<32x16xf32>, vector<32x16xf32> -> vector<96x16xf32>
    %c0_3 = arith.constant 0 : index
    %c0_4 = arith.constant 0 : index
    %18 = vector.load %arg2[%c0_3, %c0_4] : memref<32x96xbf16, #tpu.memory_space<vmem>>, vector<32x96xbf16>
    %19 = arith.truncf %17 : vector<96x16xf32> to vector<96x16xbf16>
    %cst = arith.constant dense<0.000000e+00> : vector<32x16xf32>
    %20 = tpu.matmul %18, %19, %cst {dimension_numbers = #tpu.dot_dimension_numbers<[1], [0], [0], [1], [0, 0, 1, 1], [], []>} : vector<32x96xbf16>, vector<96x16xbf16>, vector<32x16xf32> -> vector<32x16xf32>
    %c0_5 = arith.constant 0 : index
    %c0_6 = arith.constant 0 : index
    %21 = vector.load %arg3[%c0_5, %c0_6] : memref<32x1xf32, #tpu.memory_space<vmem>>, vector<32x1xf32>
    %22 = vector.broadcast %21 : vector<32x1xf32> to vector<32x16xf32>
    %23 = arith.addf %20, %22 : vector<32x16xf32>
    %cst_7 = arith.constant dense<0.000000e+00> : vector<16xf32>
    %24 = vector.multi_reduction <add>, %23, %cst_7 [0] : vector<32x16xf32> to vector<16xf32>
    %25 = vector.shape_cast %24 : vector<16xf32> to vector<1x16xf32>
    %cst_8 = arith.constant 3.200000e+01 : f32
    %26 = vector.broadcast %cst_8 : f32 to vector<1x16xf32>
    %27 = arith.divf %25, %26 : vector<1x16xf32>
    %28 = vector.broadcast %27 : vector<1x16xf32> to vector<32x16xf32>
    %29 = arith.subf %23, %28 : vector<32x16xf32>
    %30 = arith.mulf %29, %29 : vector<32x16xf32>
    %cst_9 = arith.constant dense<0.000000e+00> : vector<16xf32>
    %31 = vector.multi_reduction <add>, %30, %cst_9 [0] : vector<32x16xf32> to vector<16xf32>
    %32 = vector.shape_cast %31 : vector<16xf32> to vector<1x16xf32>
    %cst_10 = arith.constant 3.200000e+01 : f32
    %33 = vector.broadcast %cst_10 : f32 to vector<1x16xf32>
    %34 = arith.divf %32, %33 : vector<1x16xf32>
    %35 = vector.broadcast %27 : vector<1x16xf32> to vector<32x16xf32>
    %36 = arith.subf %23, %35 : vector<32x16xf32>
    %cst_11 = arith.constant 9.99999974E-6 : f32
    %37 = vector.broadcast %cst_11 : f32 to vector<1x16xf32>
    %38 = arith.addf %34, %37 : vector<1x16xf32>
    %39 = math.rsqrt %38 : vector<1x16xf32>
    %40 = vector.broadcast %39 : vector<1x16xf32> to vector<32x16xf32>
    %41 = arith.mulf %36, %40 : vector<32x16xf32>
    %c0_12 = arith.constant 0 : index
    %c0_13 = arith.constant 0 : index
    %42 = vector.load %arg4[%c0_12, %c0_13] : memref<32x1xf32, #tpu.memory_space<vmem>>, vector<32x1xf32>
    %43 = vector.broadcast %42 : vector<32x1xf32> to vector<32x16xf32>
    %44 = arith.mulf %41, %43 : vector<32x16xf32>
    %c0_14 = arith.constant 0 : index
    %c0_15 = arith.constant 0 : index
    %45 = vector.load %arg5[%c0_14, %c0_15] : memref<32x1xf32, #tpu.memory_space<vmem>>, vector<32x1xf32>
    %46 = vector.broadcast %45 : vector<32x1xf32> to vector<32x16xf32>
    %47 = arith.addf %44, %46 : vector<32x16xf32>
    %cst_16 = arith.constant 0.000000e+00 : f32
    %48 = vector.broadcast %cst_16 : f32 to vector<32x16xf32>
    %49 = arith.maximumf %47, %48 : vector<32x16xf32>
    %c1_i32_17 = arith.constant 1 : i32
    %50 = tpu.dynamic_rotate %49 by %c1_i32_17 dim 1 : vector<32x16xf32>, i32 -> vector<32x16xf32>
    %51 = vector.broadcast %6 : vector<1x16xf32> to vector<32x16xf32>
    %52 = arith.mulf %50, %51 : vector<32x16xf32>
    %c15_i32_18 = arith.constant 15 : i32
    %53 = tpu.dynamic_rotate %49 by %c15_i32_18 dim 1 : vector<32x16xf32>, i32 -> vector<32x16xf32>
    %54 = vector.broadcast %10 : vector<1x16xf32> to vector<32x16xf32>
    %55 = arith.mulf %53, %54 : vector<32x16xf32>
    %56 = tpu.concatenate %52, %49, %55 in 0 : vector<32x16xf32>, vector<32x16xf32>, vector<32x16xf32> -> vector<96x16xf32>
    %c0_19 = arith.constant 0 : index
    %c0_20 = arith.constant 0 : index
    %57 = vector.load %arg6[%c0_19, %c0_20] : memref<16x96xbf16, #tpu.memory_space<vmem>>, vector<16x96xbf16>
    %58 = arith.truncf %56 : vector<96x16xf32> to vector<96x16xbf16>
    %cst_21 = arith.constant dense<0.000000e+00> : vector<16x16xf32>
    %59 = tpu.matmul %57, %58, %cst_21 {dimension_numbers = #tpu.dot_dimension_numbers<[1], [0], [0], [1], [0, 0, 1, 1], [], []>} : vector<16x96xbf16>, vector<96x16xbf16>, vector<16x16xf32> -> vector<16x16xf32>
    %c0_22 = arith.constant 0 : index
    %c0_23 = arith.constant 0 : index
    %60 = vector.load %arg7[%c0_22, %c0_23] : memref<16x1xf32, #tpu.memory_space<vmem>>, vector<16x1xf32>
    %61 = vector.broadcast %60 : vector<16x1xf32> to vector<16x16xf32>
    %62 = arith.addf %59, %61 : vector<16x16xf32>
    %cst_24 = arith.constant 0.000000e+00 : f32
    %63 = vector.broadcast %cst_24 : f32 to vector<16x16xf32>
    %64 = arith.maximumf %62, %63 : vector<16x16xf32>
    %c0_25 = arith.constant 0 : index
    %c0_26 = arith.constant 0 : index
    %c0_27 = arith.constant 0 : index
    %65 = vector.load %arg8[%c0_25, %c0_26, %c0_27] : memref<1x16x16xf32, #tpu.memory_space<vmem>>, vector<1x16x16xf32>
    %66 = vector.shape_cast %65 : vector<1x16x16xf32> to vector<16x16xf32>
    %67 = vector.shape_cast %64 : vector<16x16xf32> to vector<1x16x16xf32>
    tpu.vector_store %arg8[%c0_25, %c0_26, %c0_27], %67 {strides = array<i32>} : memref<1x16x16xf32, #tpu.memory_space<vmem>>, vector<1x16x16xf32>,
    return
  }
  func.func @transform_0(%arg0: i32) -> (i32, i32, i32) {
    %c0_i32 = arith.constant 0 : i32
    %c0_i32_0 = arith.constant 0 : i32
    %c0_i32_1 = arith.constant 0 : i32
    return %arg0, %c0_i32, %c0_i32_0 : i32, i32, i32
  }
  func.func @transform_1(%arg0: i32) -> (i32, i32) {
    %c0_i32 = arith.constant 0 : i32
    %c0_i32_0 = arith.constant 0 : i32
    %c0_i32_1 = arith.constant 0 : i32
    return %c0_i32, %c0_i32_0 : i32, i32
  }
  func.func @transform_2(%arg0: i32) -> (i32, i32) {
    %c0_i32 = arith.constant 0 : i32
    %c0_i32_0 = arith.constant 0 : i32
    %c0_i32_1 = arith.constant 0 : i32
    return %c0_i32, %c0_i32_0 : i32, i32
  }
  func.func @transform_3(%arg0: i32) -> (i32, i32) {
    %c0_i32 = arith.constant 0 : i32
    %c0_i32_0 = arith.constant 0 : i32
    %c0_i32_1 = arith.constant 0 : i32
    return %c0_i32, %c0_i32_0 : i32, i32
  }
  func.func @transform_4(%arg0: i32) -> (i32, i32) {
    %c0_i32 = arith.constant 0 : i32
    %c0_i32_0 = arith.constant 0 : i32
    %c0_i32_1 = arith.constant 0 : i32
    return %c0_i32, %c0_i32_0 : i32, i32
  }
  func.func @transform_5(%arg0: i32) -> (i32, i32) {
    %c0_i32 = arith.constant 0 : i32
    %c0_i32_0 = arith.constant 0 : i32
    %c0_i32_1 = arith.constant 0 : i32
    return %c0_i32, %c0_i32_0 : i32, i32
  }
  func.func @transform_6(%arg0: i32) -> (i32, i32) {
    %c0_i32 = arith.constant 0 : i32
    %c0_i32_0 = arith.constant 0 : i32
    %c0_i32_1 = arith.constant 0 : i32
    return %c0_i32, %c0_i32_0 : i32, i32
  }
  func.func @transform_7(%arg0: i32) -> (i32, i32, i32) {
    %c0_i32 = arith.constant 0 : i32
    %c0_i32_0 = arith.constant 0 : i32
    %c0_i32_1 = arith.constant 0 : i32
    return %arg0, %c0_i32, %c0_i32_0 : i32, i32, i32
  }
}

</mosaic_0001>

<llo_original>
// kernel: tpu_custom_call.1
$region0: #{tpu_custom_call.1}
  #allocation0 [shape = 'u32[]', space=smem, size = 0x4, offset = 0x4, fixed_abs, tag = 'smem constant byte address 0x4 - core index']
  #allocation1 [shape = 'u32[144,128]{1,0:T(1,128)}', space=vmem, size = 0x12000, scoped, tag = 'internal scratch']
  %s0 = inlined_call_operand.vmem [shape: f32[2,32,16], index: 0, kind: input, shape index: {}]
  %s1 = inlined_call_operand.vmem [shape: bf16[32,96], index: 1, kind: input, shape index: {}]
  %s2 = inlined_call_operand.vmem [shape: f32[32,1], index: 2, kind: input, shape index: {}]
  %s3 = inlined_call_operand.vmem [shape: f32[32,1], index: 3, kind: input, shape index: {}]
  %s4 = inlined_call_operand.vmem [shape: f32[32,1], index: 4, kind: input, shape index: {}]
  %s5 = inlined_call_operand.vmem [shape: bf16[16,96], index: 5, kind: input, shape index: {}]
  %s6 = inlined_call_operand.vmem [shape: f32[16,1], index: 6, kind: input, shape index: {}]
  %s7 = inlined_call_operand.hbm [shape: f32[2,16,16], index: 7, kind: output, shape index: {}]
  %s8 = sld [smem:[#allocation0]]
  $region61: #{tpu_custom_call.1} parent=0
    _
  %s10 = ssub.s32 1, %s8
  %s11 = scalar_select 0, %s10, %s8
  $region1: #{tpu_custom_call.1} parent=0
    #allocation2 [shape = 'u8[16384]{0}', space=vmem, size = 0x4000, scoped, tag = 'output window, operand 0']
    #allocation3 [shape = 's32[2]{0}', space=sflag, size = 0x8, scoped, tag = 'scoped memory for tpu_custom_call.1']
    %12 = vsyncpa [#allocation3], 0
    %s13 = scalar_lea.sflag [#allocation3], 1
    %14 = vsyncpa %s13, 0
    loop: start=0, step=1, limit=4
    $region2: #{tpu_custom_call.1} parent=1 // loop_pre_header
      _
    $region3: #{tpu_custom_call.1} parent=1 // loop_header
      %s16 = sphi 0, %s20
      %p17 = scmp.ge.s32.totalorder %s16, 4
      %s26 = sphi 0, %s28
      %s29 = sphi 0, %s26
      %s30 = sphi 0, %s29
      %s46 = sphi 0, %s30
      %s50 = sphi 0, %s50
      %s52 = sphi 0, %s50
      %s53 = sphi 0, %s52
      %s67 = sphi 0, %s53
      %s71 = sphi 0, %s71
      %s73 = sphi 0, %s71
      %s74 = sphi 0, %s73
      %s88 = sphi 0, %s74
      %s92 = sphi 0, %s92
      %s94 = sphi 0, %s92
      %s95 = sphi 0, %s94
      %s109 = sphi 0, %s95
      %s113 = sphi 0, %s113
      %s115 = sphi 0, %s113
      %s116 = sphi 0, %s115
      %s130 = sphi 0, %s116
      %s134 = sphi 0, %s134
      %s136 = sphi 0, %s134
      %s137 = sphi 0, %s136
      %s151 = sphi 0, %s137
      %s155 = sphi 0, %s155
      %s157 = sphi 0, %s155
      %s158 = sphi 0, %s157
      %s172 = sphi 0, %s158
      %s178 = sphi 0, %s180
      %s181 = sphi 0, %s178
      %s182 = sphi 0, %s181
      %s198 = sphi 0, %s182
    $region4: #{tpu_custom_call.1} parent=1 // loop_header_branch
      %19 = sbr.rel (%p17) target = $region8
    $region5: #{tpu_custom_call.1} parent=1 // loop_body
      %s21 = ssub.s32 %s16, 1
      %s22 = ssub.s32 %s16, 2
      %s23 = sadd.s32 %s16, 1
      %s24 = ssub.s32 %s16, %s23
      %p25 = scmp.eq.s32.totalorder %s24, 0
      %s27 = sadd.s32 %s26, 1
      %s28 = scalar_select %p25, %s26, %s27
      %p31 = pneg %p25
      %p32 = scmp.eq.s32.totalorder %s16, 1
      %p33 = por %p31, %p32
      %p34 = scmp.ne.s32.totalorder %s26, %s29
      %p35 = scmp.eq.s32.totalorder %s16, 0
      %p36 = por %p34, %p35
      %p37 = scmp.ne.s32.totalorder %s26, %s29
      %p38 = scmp.eq.s32.totalorder %s21, 1
      %p39 = por %p37, %p38
      %p40 = scmp.ne.s32.totalorder %s29, %s30
      %p41 = scmp.eq.s32.totalorder %s21, 0
      %p42 = por %p40, %p41
      %p43 = scmp.ne.s32.totalorder %s29, %s30
      %p44 = scmp.eq.s32.totalorder %s22, 1
      %p45 = por %p43, %p44
      %p47 = scmp.ne.s32.totalorder %s30, %s46
      %p48 = scmp.eq.s32.totalorder %s22, 0
      %p49 = por %p47, %p48
      %s51 = sadd.s32 %s50, 1
      %p54 = scmp.eq.s32.totalorder %s16, 1
      %p55 = scmp.ne.s32.totalorder %s50, %s52
      %p56 = scmp.eq.s32.totalorder %s16, 0
      %p57 = por %p55, %p56
      %p58 = scmp.ne.s32.totalorder %s50, %s52
      %p59 = scmp.eq.s32.totalorder %s21, 1
      %p60 = por %p58, %p59
      %p61 = scmp.ne.s32.totalorder %s52, %s53
      %p62 = scmp.eq.s32.totalorder %s21, 0
      %p63 = por %p61, %p62
      %p64 = scmp.ne.s32.totalorder %s52, %s53
      %p65 = scmp.eq.s32.totalorder %s22, 1
      %p66 = por %p64, %p65
      %p68 = scmp.ne.s32.totalorder %s53, %s67
      %p69 = scmp.eq.s32.totalorder %s22, 0
      %p70 = por %p68, %p69
      %s72 = sadd.s32 %s71, 1
      %p75 = scmp.eq.s32.totalorder %s16, 1
      %p76 = scmp.ne.s32.totalorder %s71, %s73
      %p77 = scmp.eq.s32.totalorder %s16, 0
      %p78 = por %p76, %p77
      %p79 = scmp.ne.s32.totalorder %s71, %s73
      %p80 = scmp.eq.s32.totalorder %s21, 1
      %p81 = por %p79, %p80
      %p82 = scmp.ne.s32.totalorder %s73, %s74
      %p83 = scmp.eq.s32.totalorder %s21, 0
      %p84 = por %p82, %p83
      %p85 = scmp.ne.s32.totalorder %s73, %s74
      %p86 = scmp.eq.s32.totalorder %s22, 1
      %p87 = por %p85, %p86
      %p89 = scmp.ne.s32.totalorder %s74, %s88
      %p90 = scmp.eq.s32.totalorder %s22, 0
      %p91 = por %p89, %p90
      %s93 = sadd.s32 %s92, 1
      %p96 = scmp.eq.s32.totalorder %s16, 1
      %p97 = scmp.ne.s32.totalorder %s92, %s94
      %p98 = scmp.eq.s32.totalorder %s16, 0
      %p99 = por %p97, %p98
      %p100 = scmp.ne.s32.totalorder %s92, %s94
      %p101 = scmp.eq.s32.totalorder %s21, 1
      %p102 = por %p100, %p101
      %p103 = scmp.ne.s32.totalorder %s94, %s95
      %p104 = scmp.eq.s32.totalorder %s21, 0
      %p105 = por %p103, %p104
      %p106 = scmp.ne.s32.totalorder %s94, %s95
      %p107 = scmp.eq.s32.totalorder %s22, 1
      %p108 = por %p106, %p107
      %p110 = scmp.ne.s32.totalorder %s95, %s109
      %p111 = scmp.eq.s32.totalorder %s22, 0
      %p112 = por %p110, %p111
      %s114 = sadd.s32 %s113, 1
      %p117 = scmp.eq.s32.totalorder %s16, 1
      %p118 = scmp.ne.s32.totalorder %s113, %s115
      %p119 = scmp.eq.s32.totalorder %s16, 0
      %p120 = por %p118, %p119
      %p121 = scmp.ne.s32.totalorder %s113, %s115
      %p122 = scmp.eq.s32.totalorder %s21, 1
      %p123 = por %p121, %p122
      %p124 = scmp.ne.s32.totalorder %s115, %s116
      %p125 = scmp.eq.s32.totalorder %s21, 0
      %p126 = por %p124, %p125
      %p127 = scmp.ne.s32.totalorder %s115, %s116
      %p128 = scmp.eq.s32.totalorder %s22, 1
      %p129 = por %p127, %p128
      %p131 = scmp.ne.s32.totalorder %s116, %s130
      %p132 = scmp.eq.s32.totalorder %s22, 0
      %p133 = por %p131, %p132
      %s135 = sadd.s32 %s134, 1
      %p138 = scmp.eq.s32.totalorder %s16, 1
      %p139 = scmp.ne.s32.totalorder %s134, %s136
      %p140 = scmp.eq.s32.totalorder %s16, 0
      %p141 = por %p139, %p140
      %p142 = scmp.ne.s32.totalorder %s134, %s136
      %p143 = scmp.eq.s32.totalorder %s21, 1
      %p144 = por %p142, %p143
      %p145 = scmp.ne.s32.totalorder %s136, %s137
      %p146 = scmp.eq.s32.totalorder %s21, 0
      %p147 = por %p145, %p146
      %p148 = scmp.ne.s32.totalorder %s136, %s137
      %p149 = scmp.eq.s32.totalorder %s22, 1
      %p150 = por %p148, %p149
      %p152 = scmp.ne.s32.totalorder %s137, %s151
      %p153 = scmp.eq.s32.totalorder %s22, 0
      %p154 = por %p152, %p153
      %s156 = sadd.s32 %s155, 1
      %p159 = scmp.eq.s32.totalorder %s16, 1
      %p160 = scmp.ne.s32.totalorder %s155, %s157
      %p161 = scmp.eq.s32.totalorder %s16, 0
      %p162 = por %p160, %p161
      %p163 = scmp.ne.s32.totalorder %s155, %s157
      %p164 = scmp.eq.s32.totalorder %s21, 1
      %p165 = por %p163, %p164
      %p166 = scmp.ne.s32.totalorder %s157, %s158
      %p167 = scmp.eq.s32.totalorder %s21, 0
      %p168 = por %p166, %p167
      %p169 = scmp.ne.s32.totalorder %s157, %s158
      %p170 = scmp.eq.s32.totalorder %s22, 1
      %p171 = por %p169, %p170
      %p173 = scmp.ne.s32.totalorder %s158, %s172
      %p174 = scmp.eq.s32.totalorder %s22, 0
      %p175 = por %p173, %p174
      %s176 = ssub.s32 %s16, %s23
      %p177 = scmp.eq.s32.totalorder %s176, 0
      %s179 = sadd.s32 %s178, 1
      %s180 = scalar_select %p177, %s178, %s179
      %p183 = pneg %p177
      %p184 = scmp.eq.s32.totalorder %s16, 1
      %p185 = por %p183, %p184
      %p186 = scmp.ne.s32.totalorder %s178, %s181
      %p187 = scmp.eq.s32.totalorder %s16, 0
      %p188 = por %p186, %p187
      %p189 = scmp.ne.s32.totalorder %s178, %s181
      %p190 = scmp.eq.s32.totalorder %s21, 1
      %p191 = por %p189, %p190
      %p192 = scmp.ne.s32.totalorder %s181, %s182
      %p193 = scmp.eq.s32.totalorder %s21, 0
      %p194 = por %p192, %p193
      %p195 = scmp.ne.s32.totalorder %s181, %s182
      %p196 = scmp.eq.s32.totalorder %s22, 1
      %p197 = por %p195, %p196
      %p199 = scmp.ne.s32.totalorder %s182, %s198
      %p200 = scmp.eq.s32.totalorder %s22, 0
      %p201 = por %p199, %p200
      %p202 = scmp.le.s32.totalorder 1, %s16
      %p203 = scmp.lt.s32.totalorder %s16, 3
      %p204 = pnand %p202, %p203
      %p205 = pneg %p204
      // Predicated region
      $region9: #{tpu_custom_call.1} parent=5 // pred_check
        _
      $region10: #{tpu_custom_call.1} parent=5 // pred_check_branch
        %207 = sbr.rel (%p204) target = $region12
      $region11: #{tpu_custom_call.1} parent=5 // pred_region
        %s208 = ssub.s32 %s16, 1
        // Predicated region
        $region13: #{tpu_custom_call.1} parent=11 // pred_check
          %p209 = pneg %p63
        $region14: #{tpu_custom_call.1} parent=11 // pred_check_branch
          %211 = sbr.rel (%p209) target = $region16
        $region15: #{tpu_custom_call.1} parent=11 // pred_region
          _
        $region16: #{tpu_custom_call.1} parent=11 // pred_fallthru
          _
        // Predicated region
        $region17: #{tpu_custom_call.1} parent=11 // pred_check
          %p212 = pneg %p84
        $region18: #{tpu_custom_call.1} parent=11 // pred_check_branch
          %214 = sbr.rel (%p212) target = $region20
        $region19: #{tpu_custom_call.1} parent=11 // pred_region
          _
        $region20: #{tpu_custom_call.1} parent=11 // pred_fallthru
          _
        // Predicated region
        $region21: #{tpu_custom_call.1} parent=11 // pred_check
          %p215 = pneg %p105
        $region22: #{tpu_custom_call.1} parent=11 // pred_check_branch
          %217 = sbr.rel (%p215) target = $region24
        $region23: #{tpu_custom_call.1} parent=11 // pred_region
          _
        $region24: #{tpu_custom_call.1} parent=11 // pred_fallthru
          _
        // Predicated region
        $region25: #{tpu_custom_call.1} parent=11 // pred_check
          %p218 = pneg %p126
        $region26: #{tpu_custom_call.1} parent=11 // pred_check_branch
          %220 = sbr.rel (%p218) target = $region28
        $region27: #{tpu_custom_call.1} parent=11 // pred_region
          _
        $region28: #{tpu_custom_call.1} parent=11 // pred_fallthru
          _
        // Predicated region
        $region29: #{tpu_custom_call.1} parent=11 // pred_check
          %p221 = pneg %p147
        $region30: #{tpu_custom_call.1} parent=11 // pred_check_branch
          %223 = sbr.rel (%p221) target = $region32
        $region31: #{tpu_custom_call.1} parent=11 // pred_region
          _
        $region32: #{tpu_custom_call.1} parent=11 // pred_fallthru
          _
        // Predicated region
        $region33: #{tpu_custom_call.1} parent=11 // pred_check
          %p224 = pneg %p168
        $region34: #{tpu_custom_call.1} parent=11 // pred_check_branch
          %226 = sbr.rel (%p224) target = $region36
        $region35: #{tpu_custom_call.1} parent=11 // pred_region
          _
        $region36: #{tpu_custom_call.1} parent=11 // pred_fallthru
          _
      $region12: #{tpu_custom_call.1} parent=5 // pred_fallthru
        _
      %p227 = scmp.lt.s32.totalorder %s16, 2
      // Predicated region
      $region37: #{tpu_custom_call.1} parent=5 // pred_check
        %p228 = pneg %p227
      $region38: #{tpu_custom_call.1} parent=5 // pred_check_branch
        %230 = sbr.rel (%p228) target = $region40
      $region39: #{tpu_custom_call.1} parent=5 // pred_region
        // Predicated region
        $region41: #{tpu_custom_call.1} parent=39 // pred_check
          %p231 = pneg %p36
        $region42: #{tpu_custom_call.1} parent=39 // pred_check_branch
          %233 = sbr.rel (%p231) target = $region44
        $region43: #{tpu_custom_call.1} parent=39 // pred_region
          %p234 = scmp.lt.s32.totalorder %s16, 1
          %s235 = scalar_select %p234, %s16, 1
          %s236 = smul.addr %s235, 4
          %s237 = smul.addr %s236, 8
          %s238 = scalar_lea.vmem %s0, %s237
        $region44: #{tpu_custom_call.1} parent=39 // pred_fallthru
          _
      $region40: #{tpu_custom_call.1} parent=5 // pred_fallthru
        _
      %p239 = scmp.le.s32.totalorder 1, %s16
      %p240 = scmp.lt.s32.totalorder %s16, 3
      %p241 = pnand %p239, %p240
      %p242 = pneg %p241
      // Predicated region
      $region45: #{tpu_custom_call.1} parent=5 // pred_check
        _
      $region46: #{tpu_custom_call.1} parent=5 // pred_check_branch
        %244 = sbr.rel (%p241) target = $region48
      $region47: #{tpu_custom_call.1} parent=5 // pred_region
        %s245 = ssub.s32 %s16, 1
        %p246 = scmp.lt.s32.totalorder %s21, 1
        %s247 = scalar_select %p246, %s21, 1
        %s248 = smul.addr %s247, 4
        %s249 = smul.addr %s248, 8
        %s250 = scalar_lea.vmem %s0, %s249
        %p251 = pneg %p42
        %p252 = pneg %p39
        %p253 = pneg %p63
        %p254 = pneg %p60
        %p255 = pneg %p84
        %p256 = pneg %p81
        %p257 = pneg %p105
        %p258 = pneg %p102
        %p259 = pneg %p126
        %p260 = pneg %p123
        %p261 = pneg %p147
        %p262 = pneg %p144
        %p263 = pneg %p168
        %p264 = pneg %p165
        %p265 = pneg %p194
        %p266 = pneg %p191
        %s267 = sand.u32 %s181, 1
        %s268 = scalar_lea.sflag [#allocation3], %s267
        %s269 = sand.u32 %s181, 1
        %s270 = smul.addr %s269, 16
        %s271 = scalar_lea.vmem [#allocation2], %s270
        %p272 = scmp.lt.s32.totalorder %s21, 1
        %s273 = scalar_select %p272, %s21, 1
        %s274 = smul.addr %s273, 4
        %s275 = smul.addr %s274, 8
        %s276 = scalar_lea.vmem %s0, %s275
        %v278 = vld [vmem:[%s276] sm:$0xff]
        %v279 = vld [vmem:[%s276 + $0x8] sm:$0xff]
        %v280 = vld [vmem:[%s276 + $0x10] sm:$0xff]
        %v281 = vld [vmem:[%s276 + $0x18] sm:$0xff]
        %v282 = vlaneseq
        %v283 = vand.u32 %v282, 127
        %vm284 = vcmp.ne.s32.totalorder %v283, 0
        %v285 = vsel %vm284, 1, 0
        %v286 = vcvt.s32.f32 %v285
        %vm287 = vcmp.ne.s32.totalorder %v283, 15
        %v288 = vsel %vm287, 1, 0
        %v289 = vcvt.s32.f32 %v288
        %vm290 = vcmask 1047680
        %291 = vrot.lane.b32.xlu0 %v278, 16
        %v292 = vpop.permute.xlu0 %291
        %v293 = vsel %vm290, %v292, %v278
        %294 = vrot.lane.b32.xlu0 %v279, 16
        %v295 = vpop.permute.xlu0 %294
        %v296 = vsel %vm290, %v295, %v279
        %297 = vrot.lane.b32.xlu0 %v280, 16
        %v298 = vpop.permute.xlu0 %297
        %v299 = vsel %vm290, %v298, %v280
        %300 = vrot.lane.b32.xlu0 %v281, 16
        %v301 = vpop.permute.xlu0 %300
        %v302 = vsel %vm290, %v301, %v281
        %303 = vrot.lane.b32.xlu0 %v293, 16
        %v304 = vpop.permute.xlu0 %303
        %305 = vrot.lane.b32.xlu0 %v296, 16
        %v306 = vpop.permute.xlu0 %305
        %307 = vrot.lane.b32.xlu0 %v299, 16
        %v308 = vpop.permute.xlu0 %307
        %309 = vrot.lane.b32.xlu0 %v302, 16
        %v310 = vpop.permute.xlu0 %309
        %v311 = vsel %vm290, %v304, %v278
        %v312 = vsel %vm290, %v306, %v279
        %v313 = vsel %vm290, %v308, %v280
        %v314 = vsel %vm290, %v310, %v281
        %316 = vrot.lane.b32.xlu0 %v286, 15
        %v317 = vpop.permute.xlu0 %316
        %v319 = vmul.f32 %v311, %v317
        %v320 = vmul.f32 %v312, %v317
        %v321 = vmul.f32 %v313, %v317
        %v322 = vmul.f32 %v314, %v317
        %324 = vrot.lane.b32.xlu0 %v289, 1
        %v325 = vpop.permute.xlu0 %324
        %v327 = vmul.f32 %v311, %v325
        %v328 = vmul.f32 %v312, %v325
        %v329 = vmul.f32 %v313, %v325
        %v330 = vmul.f32 %v314, %v325
        %335 = vrot.lane.b32.xlu0 %v278, 15
        %v336 = vpop.permute.xlu0 %335
        %337 = vrot.lane.b32.xlu0 %v279, 15
        %v338 = vpop.permute.xlu0 %337
        %339 = vrot.lane.b32.xlu0 %v280, 15
        %v340 = vpop.permute.xlu0 %339
        %341 = vrot.lane.b32.xlu0 %v281, 15
        %v342 = vpop.permute.xlu0 %341
        %351 = vrot.lane.b32.xlu0 %v327, 14
        %v352 = vpop.permute.xlu0 %351
        %353 = vrot.lane.b32.xlu0 %v328, 14
        %v354 = vpop.permute.xlu0 %353
        %355 = vrot.lane.b32.xlu0 %v329, 14
        %v356 = vpop.permute.xlu0 %355
        %357 = vrot.lane.b32.xlu0 %v330, 14
        %v358 = vpop.permute.xlu0 %357
        %v363 = vld [vmem:[%s1] sm:$0xf]
        %v364 = vld [vmem:[%s1 + $0x4] sm:$0xf]
        %v365 = vld [vmem:[%s1 + $0x8] sm:$0xf]
        %v366 = vld [vmem:[%s1 + $0xc] sm:$0xf]
        %v367 = vpack.c.bf16 %v320, %v319
        %v368 = vpack.c.bf16 %v322, %v321
        %v369 = vpack.c.bf16 %v338, %v336
        %v370 = vpack.c.bf16 %v342, %v340
        %v371 = vpack.c.bf16 %v354, %v352
        %v372 = vpack.c.bf16 %v358, %v356
        %v373 = vld [vmem:[%s2] sm:$0xff]
        %v374 = vld [vmem:[%s2 + $0x8] sm:$0xff]
        %v375 = vld [vmem:[%s2 + $0x10] sm:$0xff]
        %v376 = vld [vmem:[%s2 + $0x18] sm:$0xff]
        %378 = vset.pattern.permute.xlu0 0
        %379 = vperm.xlu0 %378, %v373
        %v380 = vpop.permute.xlu0 %379
        %383 = vset.pattern.permute.xlu0 0
        %384 = vperm.xlu0 %383, %v374
        %v385 = vpop.permute.xlu0 %384
        %388 = vset.pattern.permute.xlu0 0
        %389 = vperm.xlu0 %388, %v375
        %v390 = vpop.permute.xlu0 %389
        %393 = vset.pattern.permute.xlu0 0
        %394 = vperm.xlu0 %393, %v376
        %v395 = vpop.permute.xlu0 %394
        %v401 = vunpack.c.l.b16 %v363
        %v402 = vunpack.c.l.b16 %v364
        %v403 = vunpack.c.l.b16 %v365
        %v404 = vunpack.c.l.b16 %v366
        %v405 = vpack.c.b16 %v402, %v401
        %v406 = vpack.c.b16 %v404, %v403
        %413 = vrot.lane.b32.xlu0 %v367, 113
        %v414 = vpop.permute.xlu0 %413
        %415 = vrot.lane.b32.xlu0 %v368, 113
        %v416 = vpop.permute.xlu0 %415
        %417 = vrot.lane.b32.xlu0 %v369, 113
        %v418 = vpop.permute.xlu0 %417
        %419 = vrot.lane.b32.xlu0 %v370, 113
        %v420 = vpop.permute.xlu0 %419
        %421 = vrot.lane.b32.xlu0 %v371, 113
        %v422 = vpop.permute.xlu0 %421
        %423 = vrot.lane.b32.xlu0 %v372, 113
        %v424 = vpop.permute.xlu0 %423
        %vm431 = vcmask 785408
        %v433 = vsel %vm431, %v405, 0
        %v436 = vsel %vm431, %v406, 0
        %438 = vmatprep.subr.bf16.mxu0 0
        %439 = vmatpush1.bf16.msra.mxu0 %v414
        %440 = vmatprep.subr.bf16.mxu0 0
        %441 = vmatpush1.bf16.msra.mxu0 %v416
        %442 = vmatprep.subr.bf16.mxu0 0
        %443 = vmatpush1.bf16.msra.mxu0 %v418
        %444 = vmatprep.subr.bf16.mxu0 0
        %445 = vmatpush1.bf16.msra.mxu0 %v420
        %446 = vmatprep.subr.bf16.mxu0 0
        %447 = vmatpush1.bf16.msra.mxu0 %v422
        %448 = vmatprep.subr.bf16.mxu0 0
        %449 = vmatpush1.bf16.msra.mxu0 %v424
        %450 = vmatprep.subr.bf16.mxu0 0
        %451 = vmatpush1.bf16.msra.mxu0 0
        %452 = vmatprep.subr.bf16.mxu0 0
        %453 = vmatpush1.bf16.msra.mxu0 0
        %454 = vmatprep.subr.bf16.mxu0 0
        %455 = vmatpush1.bf16.msra.mxu0 0
        %456 = vmatprep.subr.bf16.mxu0 0
        %457 = vmatpush1.bf16.msra.mxu0 0
        %458 = vmatprep.subr.bf16.mxu0 0
        %459 = vmatpush1.bf16.msra.mxu0 0
        %460 = vmatprep.subr.bf16.mxu0 0
        %461 = vmatpush1.bf16.msra.mxu0 0
        %462 = vmatprep.subr.bf16.mxu0 0
        %463 = vmatpush1.bf16.msra.mxu0 0
        %464 = vmatprep.subr.bf16.mxu0 0
        %465 = vmatpush1.bf16.msra.mxu0 0
        %466 = vmatprep.subr.bf16.mxu0 0
        %467 = vmatpush1.bf16.msra.mxu0 0
        %468 = vmatprep.subr.bf16.mxu0 0
        %469 = vmatpush1.bf16.msra.mxu0 0
        %470 = vmatprep.mubr.bf16.mxu0 0
        %471 = vmatmul.mubr.bf16.gmra.mrb[0].mxu0 %v433
        %v472 = vpop.f32.mrb[0].mxu0
        %v473 = vadd.f32 %v380, %v472
        %v474 = vpop.f32.mrb[0].mxu0
        %v475 = vpop.f32.mrb[0].mxu0
        %v476 = vadd.f32 %v385, %v475
        %v477 = vpop.f32.mrb[0].mxu0
        %478 = vmatprep.mubr.bf16.mxu0 0
        %479 = vmatmul.mubr.bf16.gmra.mrb[0].mxu0 %v436
        %v480 = vpop.f32.mrb[0].mxu0
        %v481 = vadd.f32 %v390, %v480
        %v482 = vpop.f32.mrb[0].mxu0
        %v483 = vpop.f32.mrb[0].mxu0
        %v484 = vadd.f32 %v395, %v483
        %v485 = vpop.f32.mrb[0].mxu0
        %486 = vdwg.mxu0
        %vm487 = vcmask 130048
        %v488 = vsel %vm487, %v473, 0.0
        %v489 = vsel %vm487, %v476, 0.0
        %v490 = vadd.f32 %v488, %v489
        %v491 = vsel %vm487, %v481, 0.0
        %v492 = vadd.f32 %v490, %v491
        %v493 = vsel %vm487, %v484, 0.0
        %v494 = vadd.f32 %v492, %v493
        %v495 = vrot.slane %v494, 4
        %v496 = vadd.f32 %v494, %v495
        %v497 = vrot.slane %v496, 2
        %v498 = vadd.f32 %v496, %v497
        %v499 = vrot.slane %v498, 1
        %v500 = vadd.f32 %v498, %v499
        %v501 = vrcp.pop 32.0
        %v502 = vmul.f32 %v500, %v501
        %v503 = vsub.f32 %v473, %v502
        %v504 = vsub.f32 %v476, %v502
        %v505 = vsub.f32 %v481, %v502
        %v506 = vsub.f32 %v484, %v502
        %v507 = vmul.f32 %v503, %v503
        %v508 = vmul.f32 %v504, %v504
        %v509 = vmul.f32 %v505, %v505
        %v510 = vmul.f32 %v506, %v506
        %v511 = vsel %vm487, %v507, 0.0
        %v512 = vsel %vm487, %v508, 0.0
        %v513 = vadd.f32 %v511, %v512
        %v514 = vsel %vm487, %v509, 0.0
        %v515 = vadd.f32 %v513, %v514
        %v516 = vsel %vm487, %v510, 0.0
        %v517 = vadd.f32 %v515, %v516
        %v518 = vrot.slane %v517, 4
        %v519 = vadd.f32 %v517, %v518
        %v520 = vrot.slane %v519, 2
        %v521 = vadd.f32 %v519, %v520
        %v522 = vrot.slane %v521, 1
        %v523 = vadd.f32 %v521, %v522
        %v524 = vmul.f32 %v523, %v501
        %v525 = vadd.f32 %v524, 1e-05
        %v526 = vrsqrt.pop %v525
        %v527 = vmul.f32 %v503, %v526
        %v528 = vmul.f32 %v504, %v526
        %v529 = vmul.f32 %v505, %v526
        %v530 = vmul.f32 %v506, %v526
        %v531 = vld [vmem:[%s3] sm:$0xff]
        %v532 = vld [vmem:[%s3 + $0x8] sm:$0xff]
        %v533 = vld [vmem:[%s3 + $0x10] sm:$0xff]
        %v534 = vld [vmem:[%s3 + $0x18] sm:$0xff]
        %536 = vset.pattern.permute.xlu0 0
        %537 = vperm.xlu0 %536, %v531
        %v538 = vpop.permute.xlu0 %537
        %541 = vset.pattern.permute.xlu0 0
        %542 = vperm.xlu0 %541, %v532
        %v543 = vpop.permute.xlu0 %542
        %546 = vset.pattern.permute.xlu0 0
        %547 = vperm.xlu0 %546, %v533
        %v548 = vpop.permute.xlu0 %547
        %551 = vset.pattern.permute.xlu0 0
        %552 = vperm.xlu0 %551, %v534
        %v553 = vpop.permute.xlu0 %552
        %v555 = vmul.f32 %v527, %v538
        %v556 = vmul.f32 %v528, %v543
        %v557 = vmul.f32 %v529, %v548
        %v558 = vmul.f32 %v530, %v553
        %v559 = vld [vmem:[%s4] sm:$0xff]
        %v560 = vld [vmem:[%s4 + $0x8] sm:$0xff]
        %v561 = vld [vmem:[%s4 + $0x10] sm:$0xff]
        %v562 = vld [vmem:[%s4 + $0x18] sm:$0xff]
        %564 = vset.pattern.permute.xlu0 0
        %565 = vperm.xlu0 %564, %v559
        %v566 = vpop.permute.xlu0 %565
        %569 = vset.pattern.permute.xlu0 0
        %570 = vperm.xlu0 %569, %v560
        %v571 = vpop.permute.xlu0 %570
        %574 = vset.pattern.permute.xlu0 0
        %575 = vperm.xlu0 %574, %v561
        %v576 = vpop.permute.xlu0 %575
        %579 = vset.pattern.permute.xlu0 0
        %580 = vperm.xlu0 %579, %v562
        %v581 = vpop.permute.xlu0 %580
        %v583 = vadd.f32 %v555, %v566
        %v584 = vadd.f32 %v556, %v571
        %v585 = vadd.f32 %v557, %v576
        %v586 = vadd.f32 %v558, %v581
        %v587 = vmax.f32 %v583, 0.0
        %v588 = vmax.f32 %v584, 0.0
        %v589 = vmax.f32 %v585, 0.0
        %v590 = vmax.f32 %v586, 0.0
        %591 = vrot.lane.b32.xlu0 %v587, 16
        %v592 = vpop.permute.xlu0 %591
        %v593 = vsel %vm290, %v592, %v587
        %594 = vrot.lane.b32.xlu0 %v588, 16
        %v595 = vpop.permute.xlu0 %594
        %v596 = vsel %vm290, %v595, %v588
        %597 = vrot.lane.b32.xlu0 %v589, 16
        %v598 = vpop.permute.xlu0 %597
        %v599 = vsel %vm290, %v598, %v589
        %600 = vrot.lane.b32.xlu0 %v590, 16
        %v601 = vpop.permute.xlu0 %600
        %v602 = vsel %vm290, %v601, %v590
        %603 = vrot.lane.b32.xlu0 %v593, 16
        %v604 = vpop.permute.xlu0 %603
        %605 = vrot.lane.b32.xlu0 %v596, 16
        %v606 = vpop.permute.xlu0 %605
        %607 = vrot.lane.b32.xlu0 %v599, 16
        %v608 = vpop.permute.xlu0 %607
        %609 = vrot.lane.b32.xlu0 %v602, 16
        %v610 = vpop.permute.xlu0 %609
        %v611 = vsel %vm290, %v604, %v587
        %v612 = vsel %vm290, %v606, %v588
        %v613 = vsel %vm290, %v608, %v589
        %v614 = vsel %vm290, %v610, %v590
        %v615 = vmul.f32 %v611, %v317
        %v616 = vmul.f32 %v612, %v317
        %v617 = vmul.f32 %v613, %v317
        %v618 = vmul.f32 %v614, %v317
        %v619 = vmul.f32 %v611, %v325
        %v620 = vmul.f32 %v612, %v325
        %v621 = vmul.f32 %v613, %v325
        %v622 = vmul.f32 %v614, %v325
        %627 = vrot.lane.b32.xlu0 %v587, 15
        %v628 = vpop.permute.xlu0 %627
        %629 = vrot.lane.b32.xlu0 %v588, 15
        %v630 = vpop.permute.xlu0 %629
        %631 = vrot.lane.b32.xlu0 %v589, 15
        %v632 = vpop.permute.xlu0 %631
        %633 = vrot.lane.b32.xlu0 %v590, 15
        %v634 = vpop.permute.xlu0 %633
        %643 = vrot.lane.b32.xlu0 %v619, 14
        %v644 = vpop.permute.xlu0 %643
        %645 = vrot.lane.b32.xlu0 %v620, 14
        %v646 = vpop.permute.xlu0 %645
        %647 = vrot.lane.b32.xlu0 %v621, 14
        %v648 = vpop.permute.xlu0 %647
        %649 = vrot.lane.b32.xlu0 %v622, 14
        %v650 = vpop.permute.xlu0 %649
        %v655 = vld [vmem:[%s5] sm:$0xf]
        %v656 = vld [vmem:[%s5 + $0x4] sm:$0xf]
        %v657 = vpack.c.bf16 %v616, %v615
        %v658 = vpack.c.bf16 %v618, %v617
        %v659 = vpack.c.bf16 %v630, %v628
        %v660 = vpack.c.bf16 %v634, %v632
        %v661 = vpack.c.bf16 %v646, %v644
        %v662 = vpack.c.bf16 %v650, %v648
        %v663 = vld [vmem:[%s6] sm:$0xff]
        %v664 = vld [vmem:[%s6 + $0x8] sm:$0xff]
        %666 = vset.pattern.permute.xlu0 0
        %667 = vperm.xlu0 %666, %v663
        %v668 = vpop.permute.xlu0 %667
        %671 = vset.pattern.permute.xlu0 0
        %672 = vperm.xlu0 %671, %v664
        %v673 = vpop.permute.xlu0 %672
        %v677 = vunpack.c.l.b16 %v655
        %v678 = vunpack.c.l.b16 %v656
        %v679 = vpack.c.b16 %v678, %v677
        %686 = vrot.lane.b32.xlu0 %v657, 113
        %v687 = vpop.permute.xlu0 %686
        %688 = vrot.lane.b32.xlu0 %v658, 113
        %v689 = vpop.permute.xlu0 %688
        %690 = vrot.lane.b32.xlu0 %v659, 113
        %v691 = vpop.permute.xlu0 %690
        %692 = vrot.lane.b32.xlu0 %v660, 113
        %v693 = vpop.permute.xlu0 %692
        %694 = vrot.lane.b32.xlu0 %v661, 113
        %v695 = vpop.permute.xlu0 %694
        %696 = vrot.lane.b32.xlu0 %v662, 113
        %v697 = vpop.permute.xlu0 %696
        %v705 = vsel %vm431, %v679, 0
        %707 = vmatprep.subr.bf16.mxu0 0
        %708 = vmatpush1.bf16.msra.mxu0 %v687
        %709 = vmatprep.subr.bf16.mxu0 0
        %710 = vmatpush1.bf16.msra.mxu0 %v689
        %711 = vmatprep.subr.bf16.mxu0 0
        %712 = vmatpush1.bf16.msra.mxu0 %v691
        %713 = vmatprep.subr.bf16.mxu0 0
        %714 = vmatpush1.bf16.msra.mxu0 %v693
        %715 = vmatprep.subr.bf16.mxu0 0
        %716 = vmatpush1.bf16.msra.mxu0 %v695
        %717 = vmatprep.subr.bf16.mxu0 0
        %718 = vmatpush1.bf16.msra.mxu0 %v697
        %719 = vmatprep.subr.bf16.mxu0 0
        %720 = vmatpush1.bf16.msra.mxu0 0
        %721 = vmatprep.subr.bf16.mxu0 0
        %722 = vmatpush1.bf16.msra.mxu0 0
        %723 = vmatprep.subr.bf16.mxu0 0
        %724 = vmatpush1.bf16.msra.mxu0 0
        %725 = vmatprep.subr.bf16.mxu0 0
        %726 = vmatpush1.bf16.msra.mxu0 0
        %727 = vmatprep.subr.bf16.mxu0 0
        %728 = vmatpush1.bf16.msra.mxu0 0
        %729 = vmatprep.subr.bf16.mxu0 0
        %730 = vmatpush1.bf16.msra.mxu0 0
        %731 = vmatprep.subr.bf16.mxu0 0
        %732 = vmatpush1.bf16.msra.mxu0 0
        %733 = vmatprep.subr.bf16.mxu0 0
        %734 = vmatpush1.bf16.msra.mxu0 0
        %735 = vmatprep.subr.bf16.mxu0 0
        %736 = vmatpush1.bf16.msra.mxu0 0
        %737 = vmatprep.subr.bf16.mxu0 0
        %738 = vmatpush1.bf16.msra.mxu0 0
        %739 = vmatprep.mubr.bf16.mxu0 0
        %740 = vmatmul.mubr.bf16.gmra.mrb[0].mxu0 %v705
        %v741 = vpop.f32.mrb[0].mxu0
        %v742 = vadd.f32 %v668, %v741
        %v743 = vpop.f32.mrb[0].mxu0
        %v744 = vpop.f32.mrb[0].mxu0
        %v745 = vadd.f32 %v673, %v744
        %v746 = vpop.f32.mrb[0].mxu0
        %747 = vdwg.mxu0
        %v748 = vmax.f32 %v742, 0.0
        %v749 = vmax.f32 %v745, 0.0
        %750 = vst.msk [vmem:[%s271] sm:$0xff] %vm487, %v748
        %751 = vst.msk [vmem:[%s271 + $0x8] sm:$0xff] %vm487, %v749
        %s752 = sand.u32 %s181, 1
        %s753 = scalar_lea.sflag [#allocation3], %s752
        %s754 = sand.u32 %s181, 1
        %s755 = smul.addr %s754, 16
        %s756 = scalar_lea.vmem [#allocation2], %s755
        // Predicated region
        $region49: #{tpu_custom_call.1} parent=47 // pred_check
          %p757 = pneg %p191
        $region50: #{tpu_custom_call.1} parent=47 // pred_check_branch
          %759 = sbr.rel (%p757) target = $region52
        $region51: #{tpu_custom_call.1} parent=47 // pred_region
          %s761 = ssub.s32 256, 256
          %762 = vsyncadd %s753, %s761
          %s763 = smul.addr %s21, 2
          %s764 = smul.addr %s763, 128
          %s765 = scalar_lea.hbm %s7, %s764
          %s766 = sshll.u32 %s756, 4
          %s767 = int_to_ptr.vmem [resolvable:$true] %s766
          %772 = dma.vmem_to_hbm [thread:$0]  %s767, 256, %s765, %s753, 128, 128, 8
        $region52: #{tpu_custom_call.1} parent=47 // pred_fallthru
          _
      $region48: #{tpu_custom_call.1} parent=5 // pred_fallthru
        _
      %p773 = scmp.le.s32.totalorder 2, %s16
      // Predicated region
      $region53: #{tpu_custom_call.1} parent=5 // pred_check
        %p774 = pneg %p773
      $region54: #{tpu_custom_call.1} parent=5 // pred_check_branch
        %776 = sbr.rel (%p774) target = $region56
      $region55: #{tpu_custom_call.1} parent=5 // pred_region
        %s777 = ssub.s32 %s16, 2
        // Predicated region
        $region57: #{tpu_custom_call.1} parent=55 // pred_check
          %p778 = pneg %p197
        $region58: #{tpu_custom_call.1} parent=55 // pred_check_branch
          %780 = sbr.rel (%p778) target = $region60
        $region59: #{tpu_custom_call.1} parent=55 // pred_region
          %s781 = sand.u32 %s182, 1
          %s782 = scalar_lea.sflag [#allocation3], %s781
          %s783 = sand.u32 %s182, 1
          %s784 = smul.addr %s783, 16
          %s785 = scalar_lea.vmem [#allocation2], %s784
          %786 = dma.done %s782, 256
        $region60: #{tpu_custom_call.1} parent=55 // pred_fallthru
          _
      $region56: #{tpu_custom_call.1} parent=5 // pred_fallthru
        _
    $region6: #{tpu_custom_call.1} parent=1 // loop_footer
      %s20 = sadd.s32 1, %s16
    $region7: #{tpu_custom_call.1} parent=1 // loop_footer_branch
      %15 = sbr.rel target = $region3
    $region8: #{tpu_custom_call.1} parent=1 // loop_exit
      _
    %787 = vsyncpa [#allocation3], 1
    %s788 = scalar_lea.sflag [#allocation3], 1
    %789 = vsyncpa %s788, 1

</llo_original>
